<compile_context>
chip_gen: v6e
topology: v6e:2x2x1
jax: 0.10.0
libtpu: 0.0.40
codegen_flags: <defaults>
</compile_context>

<pallas_src>
import jax
import jax.numpy as jnp
from jax.experimental import pallas as pl
from jax.experimental.pallas import tpu as pltpu

_NEG_PAD = -1e30  # finite "minus infinity" for padded vocab lanes (f32 only)


def _round_up(x, m):
    return ((x + m - 1) // m) * m


def _cdiv(a, b):
    return (a + b - 1) // b


def cbow_kernel(x_ref, w1_ref, b1_ref, w2_ref, b2_ref,
                logits_ref, lse_ref,
                h_ref, m_ref, s_ref):
    """Grid = (num_splits ["parallel"], tiles_per_split ["arbitrary"])."""
    j = pl.program_id(1)

    # -- first tile of this split: hidden activation + online-LSE init ------
    @pl.when(j == 0)
    def _():
        h = jnp.dot(x_ref[...], w1_ref[...],
                    preferred_element_type=jnp.float32) + b1_ref[...]
        h_ref[...] = jnp.maximum(h, 0.0)
        m_ref[...] = jnp.full((1, 1), -jnp.inf, dtype=jnp.float32)
        s_ref[...] = jnp.zeros((1, 1), dtype=jnp.float32)

    # -- every tile: logits tile + online log-sum-exp ------------------------
    logits = jnp.dot(h_ref[...].astype(w2_ref.dtype), w2_ref[...],
                     preferred_element_type=jnp.float32) + b2_ref[...]
    logits_ref[...] = logits

    m_prev = m_ref[...]
    m_new = jnp.maximum(m_prev, jnp.max(logits, axis=-1, keepdims=True))
    s_ref[...] = (s_ref[...] * jnp.exp(m_prev - m_new)
                  + jnp.sum(jnp.exp(logits - m_new), axis=-1, keepdims=True))
    m_ref[...] = m_new

    # -- last tile of this split: emit this split's log-sum-exp --------------
    @pl.when(j == pl.num_programs(1) - 1)
    def _():
        lse_ref[...] = jnp.broadcast_to(m_ref[...] + jnp.log(s_ref[...]),
                                        lse_ref.shape)


def _derive_tn(hidden, w2_itemsize):
    """Largest lane-dense vocab tile such that <=3 W2 buffers fit the budget."""
    try:
        vmem_cap = int(pltpu.get_tpu_info().vmem_capacity_bytes)
    except Exception:
        vmem_cap = 64 * 1024 * 1024  # v7x physical size: safe everywhere
    # W2 stream gets ~half of a conservative scoped budget (leave headroom on
    # 128 MiB chips, stay inside v7x's 64 MiB physical VMEM).
    stream_budget = min(vmem_cap, 96 * 1024 * 1024) // 2
    tn = stream_budget // (3 * hidden * w2_itemsize)
    tn = max(128, min(16384, (tn // 128) * 128))
    return tn, vmem_cap


def _w2_blockspec(hidden, tn, index_map, depth):
    """W2 BlockSpec, triple-buffered when supported / useful."""
    if depth > 2 and hasattr(pl, "Buffered"):
        try:
            return pl.BlockSpec((hidden, tn), index_map,
                                pipeline_mode=pl.Buffered(depth))
        except TypeError:
            pass
    return pl.BlockSpec((hidden, tn), index_map)


def cbow_forward(idx, emb, w1, b1, w2, b2, *, tn=None, num_splits=2,
                 stream_w2_bf16=False):
    ctx2 = idx.shape[0]
    n_word, n_dim = emb.shape
    cd = ctx2 * n_dim
    hidden = w1.shape[1]
    assert w1.shape[0] == cd, "W1 must be (2*context*n_dim, hidden)"

    # Optional bf16 streaming of the dominant W2 HBM stream (f32 accumulate).
    w2_itemsize = 2 if stream_w2_bf16 else 4
    if stream_w2_bf16:
        assert hidden % 16 == 0, "bf16 W2 stream needs hidden % 16 == 0"
        w2 = w2.astype(jnp.bfloat16)

    # ---- tiling: VMEM-budget-derived vocab tile, 2-way parallel split ------
    auto_tn, vmem_cap = _derive_tn(hidden, w2_itemsize)
    if tn is None:
        tn = auto_tn
    tn = max(128, _round_up(int(tn), 128))
    tn = min(tn, _round_up(n_word, 128))

    n_tiles = _cdiv(n_word, tn)
    num_splits = max(1, min(int(num_splits), n_tiles))
    tiles_per_split = _cdiv(n_tiles, num_splits)
    padded = num_splits * tiles_per_split * tn

    if padded != n_word:
        pad = padded - n_word
        w2 = jnp.pad(w2, ((0, 0), (0, pad)))                            # zero cols
        b2 = jnp.pad(b2, ((0, 0), (0, pad)), constant_values=_NEG_PAD)  # -1e30 logits

    # Embedding gather in the wrapper: XLA reads only the ctx2 rows.
    x = jnp.take(emb, idx.astype(jnp.int32), axis=0).reshape(1, cd)
    x = x.astype(jnp.float32)

    # ---- VMEM limit derived from the actual footprint ----------------------
    w2_bufs = 3 if tiles_per_split >= 3 else 2
    vmem_need = (w2_bufs * hidden * tn * w2_itemsize      # W2 stream buffers
                 + 2 * tn * 4 * 2                         # b2 + logits tiles (x2 buf)
                 + 2 * (cd * 4 + cd * hidden * 4 + hidden * 4)  # x, W1, b1
                 + hidden * 4 + 4 * 1024)                 # h/m/s scratch + slack
    vmem_limit = int(min(vmem_cap,
                         max(32 * 1024 * 1024,
                             vmem_need + vmem_need // 4 + (2 << 20))))

    vocab_tile = lambda s, j: (0, s * tiles_per_split + j)

    logits_pad, lse_arr = pl.pallas_call(
        cbow_kernel,
        out_shape=(
            jax.ShapeDtypeStruct((1, padded), jnp.float32),            # raw logits
            jax.ShapeDtypeStruct((1, 128 * num_splits), jnp.float32),  # per-split lse
        ),
        grid=(num_splits, tiles_per_split),
        in_specs=[
            pl.BlockSpec((1, cd), lambda s, j: (0, 0)),          # gathered context
            pl.BlockSpec((cd, hidden), lambda s, j: (0, 0)),     # W1 (resident)
            pl.BlockSpec((1, hidden), lambda s, j: (0, 0)),      # b1 (resident)
            _w2_blockspec(hidden, tn, vocab_tile, w2_bufs),      # W2 tile stream
            pl.BlockSpec((1, tn), vocab_tile),                   # b2 tile
        ],
        out_specs=(
            pl.BlockSpec((1, tn), vocab_tile),                   # logits tile
            pl.BlockSpec((1, 128), lambda s, j: (0, s)),         # lse of split s
        ),
        scratch_shapes=[
            pltpu.VMEM((1, hidden), jnp.float32),   # h = relu(x@W1+b1)
            pltpu.VMEM((1, 1), jnp.float32),        # running max
            pltpu.VMEM((1, 1), jnp.float32),        # running sum-exp
        ],
        compiler_params=pltpu.CompilerParams(
            dimension_semantics=("parallel", "arbitrary"),
            vmem_limit_bytes=vmem_limit,
        ),
    )(x, w1, b1, w2, b2)

    # Combine per-split log-sum-exps (padded-only splits contribute ~-1e30).
    lse_split = lse_arr[0, ::128]
    lse_total = lse_split[0]
    for k in range(1, num_splits):
        lse_total = jnp.logaddexp(lse_total, lse_split[k])

    # TODO(synk): returning (raw logits, lse) and folding this subtraction into
    # the consumer (NLL loss needs only one lane) would save this final
    # full-vocab read+write (~2/hidden of the kernel's HBM traffic); kept here
    # to preserve the module's log_softmax output contract.
    return logits_pad[:, :n_word] - lse_total


def cbow_reference(idx, emb, w1, b1, w2, b2):
    x = emb[idx].reshape(1, -1)
    h = jnp.maximum(x @ w1 + b1, 0.0)
    logits = h @ w2 + b2
    return jax.nn.log_softmax(logits, axis=-1)


if __name__ == "__main__":
    def run_case(n_word, n_dim, context_size, hidden, *, tn=None,
                 stream_w2_bf16=False, tol=1e-4):
        ctx2 = 2 * context_size
        key = jax.random.PRNGKey(0)
        k_emb, k_w1, k_b1, k_w2, k_b2, k_idx = jax.random.split(key, 6)

        emb = jax.random.normal(k_emb, (n_word, n_dim), dtype=jnp.float32)
        w1 = jax.random.normal(k_w1, (ctx2 * n_dim, hidden), jnp.float32) * 0.1
        b1 = jax.random.normal(k_b1, (1, hidden), jnp.float32) * 0.1
        w2 = jax.random.normal(k_w2, (hidden, n_word), jnp.float32) * 0.1
        b2 = jax.random.normal(k_b2, (1, n_word), jnp.float32) * 0.1
        idx = jax.random.randint(k_idx, (ctx2,), 0, n_word, dtype=jnp.int32)

        out = cbow_forward(idx, emb, w1, b1, w2, b2, tn=tn,
                           stream_w2_bf16=stream_w2_bf16)
        out = jax.block_until_ready(out)
        ref = cbow_reference(idx, emb, w1, b1, w2, b2)

        assert out.shape == (1, n_word), out.shape
        err = float(jnp.max(jnp.abs(out - ref)))
        assert err < tol, (n_word, stream_w2_bf16, err)

    # Module-default hidden=128; small vocab -> single tile / single split.
    run_case(32, 16, 2, 128, tol=1e-4)
    # Multi-tile vocab -> 2-way "parallel" split + Buffered(3) W2 stream.
    run_case(1500, 16, 2, 128, tn=256, tol=1e-4)
    # Same, with bf16-streamed W2 (f32 accumulation).
    run_case(1500, 16, 2, 128, tn=256, stream_w2_bf16=True, tol=5e-2)

    print("KERNEL_OK")
</pallas_src>

<mosaic_0001>
module attributes {stable_mosaic.version = 11 : i64} {
  func.func @cbow_kernel(%arg0: i32, %arg1: i32, %arg2: memref<1x64xf32, #tpu.memory_space<vmem>>, %arg3: memref<64x128xf32, #tpu.memory_space<vmem>>, %arg4: memref<1x128xf32, #tpu.memory_space<vmem>>, %arg5: memref<128x128xf32, #tpu.memory_space<vmem>>, %arg6: memref<1x128xf32, #tpu.memory_space<vmem>>, %arg7: memref<1x128xf32, #tpu.memory_space<vmem>>, %arg8: memref<1x128xf32, #tpu.memory_space<vmem>>, %arg9: memref<1x128xf32, #tpu.memory_space<vmem>>, %arg10: memref<1x1xf32, #tpu.memory_space<vmem>>, %arg11: memref<1x1xf32, #tpu.memory_space<vmem>>) attributes {dimension_semantics = [#tpu.dimension_semantics<parallel>, #tpu.dimension_semantics<arbitrary>], iteration_bounds = array<i64: 1, 1>, scalar_prefetch = 0 : i64, scratch_operands = 3 : i64, tpu.core_type = #tpu.core_type<tc>, window_params = [{pipeline_mode = #tpu.pipeline_mode<synchronous>, transform_indices = @transform_0, window_bounds = array<i64: 1, 64>}, {pipeline_mode = #tpu.pipeline_mode<synchronous>, transform_indices = @transform_1, window_bounds = array<i64: 64, 128>}, {pipeline_mode = #tpu.pipeline_mode<synchronous>, transform_indices = @transform_2, window_bounds = array<i64: 1, 128>}, {transform_indices = @transform_3, window_bounds = array<i64: 128, 128>}, {transform_indices = @transform_4, window_bounds = array<i64: 1, 128>}, {transform_indices = @transform_5, window_bounds = array<i64: 1, 128>}, {transform_indices = @transform_6, window_bounds = array<i64: 1, 128>}]} {
    %c0_i32 = arith.constant 0 : i32
    %0 = arith.cmpi eq, %arg1, %c0_i32 : i32
    %1 = arith.extui %0 : i1 to i32
    %c0_i32_0 = arith.constant 0 : i32
    %2 = arith.cmpi ne, %1, %c0_i32_0 : i32
    scf.if %2 {
      %c0_20 = arith.constant 0 : index
      %c0_21 = arith.constant 0 : index
      %28 = vector.load %arg2[%c0_20, %c0_21] : memref<1x64xf32, #tpu.memory_space<vmem>>, vector<1x64xf32>
      %c0_22 = arith.constant 0 : index
      %c0_23 = arith.constant 0 : index
      %29 = vector.load %arg3[%c0_22, %c0_23] : memref<64x128xf32, #tpu.memory_space<vmem>>, vector<64x128xf32>
      %cst_24 = arith.constant dense<0.000000e+00> : vector<1x128xf32>
      %30 = tpu.matmul %28, %29, %cst_24 {dimension_numbers = #tpu.dot_dimension_numbers<[1], [0], [0], [1], [0, 0, 1, 1], [], []>} : vector<1x64xf32>, vector<64x128xf32>, vector<1x128xf32> -> vector<1x128xf32>
      %c0_25 = arith.constant 0 : index
      %c0_26 = arith.constant 0 : index
      %31 = vector.load %arg4[%c0_25, %c0_26] : memref<1x128xf32, #tpu.memory_space<vmem>>, vector<1x128xf32>
      %32 = arith.addf %30, %31 : vector<1x128xf32>
      %cst_27 = arith.constant 0.000000e+00 : f32
      %33 = vector.broadcast %cst_27 : f32 to vector<1x128xf32>
      %34 = arith.maximumf %32, %33 : vector<1x128xf32>
      %c0_28 = arith.constant 0 : index
      %c0_29 = arith.constant 0 : index
      %35 = vector.load %arg9[%c0_28, %c0_29] : memref<1x128xf32, #tpu.memory_space<vmem>>, vector<1x128xf32>
      tpu.vector_store %arg9[%c0_28, %c0_29], %34 {strides = array<i32>} : memref<1x128xf32, #tpu.memory_space<vmem>>, vector<1x128xf32>,
      %cst_30 = arith.constant 0xFF800000 : f32
      %36 = vector.broadcast %cst_30 : f32 to vector<1x1xf32>
      %c0_31 = arith.constant 0 : index
      %c0_32 = arith.constant 0 : index
      %37 = vector.load %arg10[%c0_31, %c0_32] : memref<1x1xf32, #tpu.memory_space<vmem>>, vector<1x1xf32>
      tpu.vector_store %arg10[%c0_31, %c0_32], %36 {strides = array<i32>} : memref<1x1xf32, #tpu.memory_space<vmem>>, vector<1x1xf32>,
      %cst_33 = arith.constant 0.000000e+00 : f32
      %38 = vector.broadcast %cst_33 : f32 to vector<1x1xf32>
      %c0_34 = arith.constant 0 : index
      %c0_35 = arith.constant 0 : index
      %39 = vector.load %arg11[%c0_34, %c0_35] : memref<1x1xf32, #tpu.memory_space<vmem>>, vector<1x1xf32>
      tpu.vector_store %arg11[%c0_34, %c0_35], %38 {strides = array<i32>} : memref<1x1xf32, #tpu.memory_space<vmem>>, vector<1x1xf32>,
    } else {
    }
    %c0 = arith.constant 0 : index
    %c0_1 = arith.constant 0 : index
    %3 = vector.load %arg9[%c0, %c0_1] : memref<1x128xf32, #tpu.memory_space<vmem>>, vector<1x128xf32>
    %c0_2 = arith.constant 0 : index
    %c0_3 = arith.constant 0 : index
    %4 = vector.load %arg5[%c0_2, %c0_3] : memref<128x128xf32, #tpu.memory_space<vmem>>, vector<128x128xf32>
    %cst = arith.constant dense<0.000000e+00> : vector<1x128xf32>
    %5 = tpu.matmul %3, %4, %cst {dimension_numbers = #tpu.dot_dimension_numbers<[1], [0], [0], [1], [0, 0, 1, 1], [], []>} : vector<1x128xf32>, vector<128x128xf32>, vector<1x128xf32> -> vector<1x128xf32>
    %c0_4 = arith.constant 0 : index
    %c0_5 = arith.constant 0 : index
    %6 = vector.load %arg6[%c0_4, %c0_5] : memref<1x128xf32, #tpu.memory_space<vmem>>, vector<1x128xf32>
    %7 = arith.addf %5, %6 : vector<1x128xf32>
    %c0_6 = arith.constant 0 : index
    %c0_7 = arith.constant 0 : index
    %8 = vector.load %arg7[%c0_6, %c0_7] : memref<1x128xf32, #tpu.memory_space<vmem>>, vector<1x128xf32>
    tpu.vector_store %arg7[%c0_6, %c0_7], %7 {strides = array<i32>} : memref<1x128xf32, #tpu.memory_space<vmem>>, vector<1x128xf32>,
    %c0_8 = arith.constant 0 : index
    %c0_9 = arith.constant 0 : index
    %9 = vector.load %arg10[%c0_8, %c0_9] : memref<1x1xf32, #tpu.memory_space<vmem>>, vector<1x1xf32>
    %cst_10 = arith.constant dense<0xFF800000> : vector<1xf32>
    %10 = vector.multi_reduction <maximumf>, %7, %cst_10 [1] : vector<1x128xf32> to vector<1xf32>
    %11 = vector.shape_cast %10 : vector<1xf32> to vector<1x1xf32>
    %12 = arith.maximumf %9, %11 : vector<1x1xf32>
    %c0_11 = arith.constant 0 : index
    %c0_12 = arith.constant 0 : index
    %13 = vector.load %arg11[%c0_11, %c0_12] : memref<1x1xf32, #tpu.memory_space<vmem>>, vector<1x1xf32>
    %14 = arith.subf %9, %12 : vector<1x1xf32>
    %15 = math.exp %14 : vector<1x1xf32>
    %16 = arith.mulf %13, %15 : vector<1x1xf32>
    %17 = vector.broadcast %12 : vector<1x1xf32> to vector<1x128xf32>
    %18 = arith.subf %7, %17 : vector<1x128xf32>
    %19 = math.exp %18 : vector<1x128xf32>
    %cst_13 = arith.constant dense<0.000000e+00> : vector<1xf32>
    %20 = vector.multi_reduction <add>, %19, %cst_13 [1] : vector<1x128xf32> to vector<1xf32>
    %21 = vector.shape_cast %20 : vector<1xf32> to vector<1x1xf32>
    %22 = arith.addf %16, %21 : vector<1x1xf32>
    %c0_14 = arith.constant 0 : index
    %c0_15 = arith.constant 0 : index
    %23 = vector.load %arg11[%c0_14, %c0_15] : memref<1x1xf32, #tpu.memory_space<vmem>>, vector<1x1xf32>
    tpu.vector_store %arg11[%c0_14, %c0_15], %22 {strides = array<i32>} : memref<1x1xf32, #tpu.memory_space<vmem>>, vector<1x1xf32>,
    %c0_16 = arith.constant 0 : index
    %c0_17 = arith.constant 0 : index
    %24 = vector.load %arg10[%c0_16, %c0_17] : memref<1x1xf32, #tpu.memory_space<vmem>>, vector<1x1xf32>
    tpu.vector_store %arg10[%c0_16, %c0_17], %12 {strides = array<i32>} : memref<1x1xf32, #tpu.memory_space<vmem>>, vector<1x1xf32>,
    %c0_i32_18 = arith.constant 0 : i32
    %25 = arith.cmpi eq, %arg1, %c0_i32_18 : i32
    %26 = arith.extui %25 : i1 to i32
    %c0_i32_19 = arith.constant 0 : i32
    %27 = arith.cmpi ne, %26, %c0_i32_19 : i32
    scf.if %27 {
      %c0_20 = arith.constant 0 : index
      %c0_21 = arith.constant 0 : index
      %28 = vector.load %arg10[%c0_20, %c0_21] : memref<1x1xf32, #tpu.memory_space<vmem>>, vector<1x1xf32>
      %c0_22 = arith.constant 0 : index
      %c0_23 = arith.constant 0 : index
      %29 = vector.load %arg11[%c0_22, %c0_23] : memref<1x1xf32, #tpu.memory_space<vmem>>, vector<1x1xf32>
      %30 = math.log %29 : vector<1x1xf32>
      %31 = arith.addf %28, %30 : vector<1x1xf32>
      %32 = vector.shape_cast %31 : vector<1x1xf32> to vector<1x1xf32>
      %33 = vector.broadcast %32 : vector<1x1xf32> to vector<1x128xf32>
      %c0_24 = arith.constant 0 : index
      %c0_25 = arith.constant 0 : index
      %34 = vector.load %arg8[%c0_24, %c0_25] : memref<1x128xf32, #tpu.memory_space<vmem>>, vector<1x128xf32>
      tpu.vector_store %arg8[%c0_24, %c0_25], %33 {strides = array<i32>} : memref<1x128xf32, #tpu.memory_space<vmem>>, vector<1x128xf32>,
    } else {
    }
    return
  }
  func.func @transform_0(%arg0: i32, %arg1: i32) -> (i32, i32) {
    %c0_i32 = arith.constant 0 : i32
    %c0_i32_0 = arith.constant 0 : i32
    %c0_i32_1 = arith.constant 0 : i32
    return %c0_i32, %c0_i32_0 : i32, i32
  }
  func.func @transform_1(%arg0: i32, %arg1: i32) -> (i32, i32) {
    %c0_i32 = arith.constant 0 : i32
    %c0_i32_0 = arith.constant 0 : i32
    %c0_i32_1 = arith.constant 0 : i32
    return %c0_i32, %c0_i32_0 : i32, i32
  }
  func.func @transform_2(%arg0: i32, %arg1: i32) -> (i32, i32) {
    %c0_i32 = arith.constant 0 : i32
    %c0_i32_0 = arith.constant 0 : i32
    %c0_i32_1 = arith.constant 0 : i32
    return %c0_i32, %c0_i32_0 : i32, i32
  }
  func.func @transform_3(%arg0: i32, %arg1: i32) -> (i32, i32) {
    %c1_i32 = arith.constant 1 : i32
    %0 = arith.muli %arg0, %c1_i32 : i32
    %1 = arith.addi %0, %arg1 : i32
    %c0_i32 = arith.constant 0 : i32
    %c0_i32_0 = arith.constant 0 : i32
    return %c0_i32, %1 : i32, i32
  }
  func.func @transform_4(%arg0: i32, %arg1: i32) -> (i32, i32) {
    %c1_i32 = arith.constant 1 : i32
    %0 = arith.muli %arg0, %c1_i32 : i32
    %1 = arith.addi %0, %arg1 : i32
    %c0_i32 = arith.constant 0 : i32
    %c0_i32_0 = arith.constant 0 : i32
    return %c0_i32, %1 : i32, i32
  }
  func.func @transform_5(%arg0: i32, %arg1: i32) -> (i32, i32) {
    %c1_i32 = arith.constant 1 : i32
    %0 = arith.muli %arg0, %c1_i32 : i32
    %1 = arith.addi %0, %arg1 : i32
    %c0_i32 = arith.constant 0 : i32
    %c0_i32_0 = arith.constant 0 : i32
    return %c0_i32, %1 : i32, i32
  }
  func.func @transform_6(%arg0: i32, %arg1: i32) -> (i32, i32) {
    %c0_i32 = arith.constant 0 : i32
    %c0_i32_0 = arith.constant 0 : i32
    return %c0_i32, %arg0 : i32, i32
  }
}

</mosaic_0001>

<llo_original>
// kernel: tpu_custom_call.1
$region0: #{tpu_custom_call.1}
  #allocation0 [shape = 'u32[]', space=smem, size = 0x4, offset = 0x4, fixed_abs, tag = 'smem constant byte address 0x4 - core index']
  #allocation1 [shape = 'u32[144,128]{1,0:T(1,128)}', space=vmem, size = 0x12000, scoped, tag = 'internal scratch']
  #allocation2 [shape = 'f32[1,128]{1,0:T(1,128)}', space=vmem, size = 0x200, scoped, tag = 'scratch operand']
  #allocation3 [shape = 'f32[1,1]{1,0:T(1,128)}', space=vmem, size = 0x200, scoped, tag = 'scratch operand']
  #allocation4 [shape = 'f32[1,1]{1,0:T(1,128)}', space=vmem, size = 0x200, scoped, tag = 'scratch operand']
  %s0 = inlined_call_operand.hbm [shape: f32[1,64], index: 0, kind: input, shape index: {}]
  %s1 = inlined_call_operand.hbm [shape: f32[64,128], index: 1, kind: input, shape index: {}]
  %s2 = inlined_call_operand.vmem [shape: f32[1,128], index: 2, kind: input, shape index: {}]
  %s3 = inlined_call_operand.hbm [shape: f32[128,128], index: 3, kind: input, shape index: {}]
  %s4 = inlined_call_operand.vmem [shape: f32[1,128], index: 4, kind: input, shape index: {}]
  %s5 = inlined_call_operand.hbm [shape: f32[1,128], index: 5, kind: output, shape index: {0}]
  %s6 = inlined_call_operand.hbm [shape: f32[1,128], index: 6, kind: output, shape index: {1}]
  %7 = xla_tuple %s5, %s6
  %s8 = sld [smem:[#allocation0]]
  $region58: #{tpu_custom_call.1} parent=0
    _
  %s10 = ssub.s32 1, %s8
  %s11 = scalar_select 0, %s10, %s8
  $region1: #{tpu_custom_call.1} parent=0
    #allocation5 [shape = 'u8[512]{0}', space=vmem, size = 0x400, scoped, tag = 'input window, operand 0, single buffered']
    #allocation6 [shape = 's32[1]{0}', space=sflag, size = 0x4, scoped, tag = 'scoped memory for tpu_custom_call.1']
    #allocation7 [shape = 's32[1]{0}', space=sflag, size = 0x4, scoped, tag = 'scoped memory for tpu_custom_call.1']
    #allocation8 [shape = 'u8[32768]{0}', space=vmem, size = 0x8000, scoped, tag = 'input window, operand 1, single buffered']
    #allocation9 [shape = 's32[1]{0}', space=sflag, size = 0x4, scoped, tag = 'scoped memory for tpu_custom_call.1']
    #allocation10 [shape = 'u8[65536]{0}', space=vmem, size = 0x10000, scoped, tag = 'input window, operand 3, single buffered']
    #allocation11 [shape = 'u8[512]{0}', space=vmem, size = 0x400, scoped, tag = 'output window, operand 0, single buffered']
    #allocation12 [shape = 'u8[512]{0}', space=vmem, size = 0x400, scoped, tag = 'output window, operand 1, single buffered']
    #allocation13 [shape = 's32[1]{0}', space=sflag, size = 0x4, scoped, tag = 'scoped memory for tpu_custom_call.1']
    %12 = vsyncpa [#allocation6], 0
    %13 = vsyncpa [#allocation9], 0
    %14 = vsyncpa [#allocation7], 0
    %15 = vsyncpa [#allocation13], 0
    // Predicated region
    $region2: #{tpu_custom_call.1} parent=1 // pred_check
      _
    $region3: #{tpu_custom_call.1} parent=1 // pred_check_branch
      %17 = sbr.rel (0) target = $region5
    $region4: #{tpu_custom_call.1} parent=1 // pred_region
      %s19 = ssub.s32 16, 16
      %20 = vsyncadd [#allocation6], %s19
      %s22 = sshll.u32 [#allocation5], 4
      %s23 = int_to_ptr.vmem [resolvable:$true] %s22
      %25 = dma.hbm_to_vmem [thread:$0]  %s0, 16, %s23, [#allocation6]
    $region5: #{tpu_custom_call.1} parent=1 // pred_fallthru
      _
    // Predicated region
    $region6: #{tpu_custom_call.1} parent=1 // pred_check
      _
    $region7: #{tpu_custom_call.1} parent=1 // pred_check_branch
      %27 = sbr.rel (0) target = $region9
    $region8: #{tpu_custom_call.1} parent=1 // pred_region
      %s29 = ssub.s32 1024, 1024
      %30 = vsyncadd [#allocation9], %s29
      %s31 = sshll.u32 [#allocation8], 4
      %s32 = int_to_ptr.vmem [resolvable:$true] %s31
      %37 = dma.hbm_to_vmem [thread:$0]  %s1, 1024, %s32, [#allocation9], 128, 128, 8
    $region9: #{tpu_custom_call.1} parent=1 // pred_fallthru
      _
    // Predicated region
    $region10: #{tpu_custom_call.1} parent=1 // pred_check
      _
    $region11: #{tpu_custom_call.1} parent=1 // pred_check_branch
      %39 = sbr.rel (0) target = $region13
    $region12: #{tpu_custom_call.1} parent=1 // pred_region
      _
    $region13: #{tpu_custom_call.1} parent=1 // pred_fallthru
      _
    // Predicated region
    $region14: #{tpu_custom_call.1} parent=1 // pred_check
      _
    $region15: #{tpu_custom_call.1} parent=1 // pred_check_branch
      %41 = sbr.rel (0) target = $region17
    $region16: #{tpu_custom_call.1} parent=1 // pred_region
      %s42 = sadd.s32 0, 0
      %s44 = ssub.s32 2048, 2048
      %45 = vsyncadd [#allocation9], %s44
      %s46 = smul.addr %s42, 128
      %s47 = scalar_lea.hbm %s3, %s46
      %s48 = sshll.u32 [#allocation10], 4
      %s49 = int_to_ptr.vmem [resolvable:$true] %s48
      %54 = dma.hbm_to_vmem [thread:$0]  %s47, 2048, %s49, [#allocation9], 128, 128, 8
    $region17: #{tpu_custom_call.1} parent=1 // pred_fallthru
      _
    // Predicated region
    $region18: #{tpu_custom_call.1} parent=1 // pred_check
      _
    $region19: #{tpu_custom_call.1} parent=1 // pred_check_branch
      %56 = sbr.rel (0) target = $region21
    $region20: #{tpu_custom_call.1} parent=1 // pred_region
      %s57 = sadd.s32 0, 0
      %p58 = scmp.lt.s32.totalorder %s57, 0
      %s59 = scalar_select %p58, %s57, 0
      %s60 = scalar_lea.vmem %s4, %s59
      %s61 = sadd.s32 0, 0
    $region21: #{tpu_custom_call.1} parent=1 // pred_fallthru
      _
    // Predicated region
    $region22: #{tpu_custom_call.1} parent=1 // pred_check
      _
    $region23: #{tpu_custom_call.1} parent=1 // pred_check_branch
      %63 = sbr.rel (0) target = $region25
    $region24: #{tpu_custom_call.1} parent=1 // pred_region
      %64 = dma.done [#allocation6], 16
    $region25: #{tpu_custom_call.1} parent=1 // pred_fallthru
      _
    // Predicated region
    $region26: #{tpu_custom_call.1} parent=1 // pred_check
      _
    $region27: #{tpu_custom_call.1} parent=1 // pred_check_branch
      %66 = sbr.rel (0) target = $region29
    $region28: #{tpu_custom_call.1} parent=1 // pred_region
      %67 = dma.done [#allocation9], 1024
    $region29: #{tpu_custom_call.1} parent=1 // pred_fallthru
      _
    // Predicated region
    $region30: #{tpu_custom_call.1} parent=1 // pred_check
      _
    $region31: #{tpu_custom_call.1} parent=1 // pred_check_branch
      %69 = sbr.rel (0) target = $region33
    $region32: #{tpu_custom_call.1} parent=1 // pred_region
      %70 = dma.done [#allocation9], 2048
    $region33: #{tpu_custom_call.1} parent=1 // pred_fallthru
      _
    %s71 = sadd.s32 0, 0
    %p72 = scmp.lt.s32.totalorder %s71, 0
    %s73 = scalar_select %p72, %s71, 0
    %s74 = scalar_lea.vmem %s4, %s73
    %s75 = sadd.s32 0, 0
    %s76 = sadd.s32 0, 0
    %p77 = scmp.lt.s32.totalorder %s76, 0
    %s78 = scalar_select %p77, %s76, 0
    %s79 = scalar_lea.vmem %s4, %s78
    %s80 = sadd.s32 0, 0
    %s81 = sadd.s32 0, 0
    %p82 = scmp.eq.s32.totalorder 0, 0
    // Predicated region
    $region34: #{tpu_custom_call.1} parent=1 // pred_check
      %p83 = pneg %p82
    $region35: #{tpu_custom_call.1} parent=1 // pred_check_branch
      %85 = sbr.rel (%p83) target = $region37
    $region36: #{tpu_custom_call.1} parent=1 // pred_region
      %v86 = vld [vmem:[#allocation5] sm:$0x1]
      %v87 = vld [vmem:[#allocation8] sm:$0xff]
      %v88 = vld [vmem:[#allocation8 + $0x8] sm:$0xff]
      %v89 = vld [vmem:[#allocation8 + $0x10] sm:$0xff]
      %v90 = vld [vmem:[#allocation8 + $0x18] sm:$0xff]
      %v91 = vld [vmem:[#allocation8 + $0x20] sm:$0xff]
      %v92 = vld [vmem:[#allocation8 + $0x28] sm:$0xff]
      %v93 = vld [vmem:[#allocation8 + $0x30] sm:$0xff]
      %v94 = vld [vmem:[#allocation8 + $0x38] sm:$0xff]
      %v95 = vld [vmem:[%s2] sm:$0x1]
      %vm96 = vcmask 523264
      %v98 = vsel %vm96, %v86, 0
      %100 = vmatprep.subr.mxu0 0.0
      %101 = vmatpush1.msra.mxu0 0.0
      %102 = vmatprep.subr.mxu0 0.0
      %103 = vmatpush1.msra.mxu0 0.0
      %104 = vmatprep.subr.mxu0 0.0
      %105 = vmatpush1.msra.mxu0 0.0
      %106 = vmatprep.subr.mxu0 0.0
      %107 = vmatpush1.msra.mxu0 0.0
      %108 = vmatprep.subr.mxu0 0.0
      %109 = vmatpush1.msra.mxu0 0.0
      %110 = vmatprep.subr.mxu0 0.0
      %111 = vmatpush1.msra.mxu0 0.0
      %112 = vmatprep.subr.mxu0 0.0
      %113 = vmatpush1.msra.mxu0 0.0
      %114 = vmatprep.subr.mxu0 0.0
      %115 = vmatpush1.msra.mxu0 0.0
      %116 = vmatprep.subr.mxu0 0.0
      %117 = vmatpush1.msra.mxu0 %v94
      %118 = vmatprep.subr.mxu0 0.0
      %119 = vmatpush1.msra.mxu0 %v93
      %120 = vmatprep.subr.mxu0 0.0
      %121 = vmatpush1.msra.mxu0 %v92
      %122 = vmatprep.subr.mxu0 0.0
      %123 = vmatpush1.msra.mxu0 %v91
      %124 = vmatprep.subr.mxu0 0.0
      %125 = vmatpush1.msra.mxu0 %v90
      %126 = vmatprep.subr.mxu0 0.0
      %127 = vmatpush1.msra.mxu0 %v89
      %128 = vmatprep.subr.mxu0 0.0
      %129 = vmatpush1.msra.mxu0 %v88
      %130 = vmatprep.subr.mxu0 0.0
      %131 = vmatpush1.msra.mxu0 %v87
      %132 = vmatprep.subr.mxu0 0.0
      %133 = vmatpush2.msra.mxu0 0.0
      %134 = vmatprep.subr.mxu0 0.0
      %135 = vmatpush2.msra.mxu0 0.0
      %136 = vmatprep.subr.mxu0 0.0
      %137 = vmatpush2.msra.mxu0 0.0
      %138 = vmatprep.subr.mxu0 0.0
      %139 = vmatpush2.msra.mxu0 0.0
      %140 = vmatprep.subr.mxu0 0.0
      %141 = vmatpush2.msra.mxu0 0.0
      %142 = vmatprep.subr.mxu0 0.0
      %143 = vmatpush2.msra.mxu0 0.0
      %144 = vmatprep.subr.mxu0 0.0
      %145 = vmatpush2.msra.mxu0 0.0
      %146 = vmatprep.subr.mxu0 0.0
      %147 = vmatpush2.msra.mxu0 0.0
      %148 = vmatprep.subr.mxu0 0.0
      %149 = vmatpush2.msra.mxu0 0.0
      %150 = vmatprep.subr.mxu0 0.0
      %151 = vmatpush2.msra.mxu0 0.0
      %152 = vmatprep.subr.mxu0 0.0
      %153 = vmatpush2.msra.mxu0 0.0
      %154 = vmatprep.subr.mxu0 0.0
      %155 = vmatpush2.msra.mxu0 0.0
      %156 = vmatprep.subr.mxu0 0.0
      %157 = vmatpush2.msra.mxu0 0.0
      %158 = vmatprep.subr.mxu0 0.0
      %159 = vmatpush2.msra.mxu0 0.0
      %160 = vmatprep.subr.mxu0 0.0
      %161 = vmatpush2.msra.mxu0 0.0
      %162 = vmatprep.subr.mxu0 0.0
      %163 = vmatpush2.msra.mxu0 0.0
      %164 = vmatprep.mubr.f32.mxu0 0.0
      %165 = vmatmul.mubr.f32.gmra.mxu0 %v98
      %v166 = vpop.f32.mrf.mxu0
      %v167 = vadd.f32 %v95, %v166
      %v168 = vpop.f32.mrf.mxu0
      %169 = vdwg.mxu0
      %v170 = vmax.f32 %v167, 0.0
      %171 = vst [vmem:[#allocation2] sm:$0x1] %v170
      %vm172 = vcmask 0
      %173 = vst.msk [vmem:[#allocation3] sm:$0x1] %vm172, -inf
      %174 = vst.msk [vmem:[#allocation4] sm:$0x1] %vm172, 0.0
    $region37: #{tpu_custom_call.1} parent=1 // pred_fallthru
      _
    %v175 = vld [vmem:[#allocation2] sm:$0x1]
    %v176 = vld [vmem:[#allocation10] sm:$0xff]
    %v177 = vld [vmem:[#allocation10 + $0x8] sm:$0xff]
    %v178 = vld [vmem:[#allocation10 + $0x10] sm:$0xff]
    %v179 = vld [vmem:[#allocation10 + $0x18] sm:$0xff]
    %v180 = vld [vmem:[#allocation10 + $0x20] sm:$0xff]
    %v181 = vld [vmem:[#allocation10 + $0x28] sm:$0xff]
    %v182 = vld [vmem:[#allocation10 + $0x30] sm:$0xff]
    %v183 = vld [vmem:[#allocation10 + $0x38] sm:$0xff]
    %v184 = vld [vmem:[#allocation10 + $0x40] sm:$0xff]
    %v185 = vld [vmem:[#allocation10 + $0x48] sm:$0xff]
    %v186 = vld [vmem:[#allocation10 + $0x50] sm:$0xff]
    %v187 = vld [vmem:[#allocation10 + $0x58] sm:$0xff]
    %v188 = vld [vmem:[#allocation10 + $0x60] sm:$0xff]
    %v189 = vld [vmem:[#allocation10 + $0x68] sm:$0xff]
    %v190 = vld [vmem:[#allocation10 + $0x70] sm:$0xff]
    %v191 = vld [vmem:[#allocation10 + $0x78] sm:$0xff]
    %v192 = vld [vmem:[%s79] sm:$0x1]
    %193 = vmatprep.subr.mxu0 0.0
    %194 = vmatpush1.msra.mxu0 %v191
    %195 = vmatprep.subr.mxu0 0.0
    %196 = vmatpush1.msra.mxu0 %v190
    %197 = vmatprep.subr.mxu0 0.0
    %198 = vmatpush1.msra.mxu0 %v189
    %199 = vmatprep.subr.mxu0 0.0
    %200 = vmatpush1.msra.mxu0 %v188
    %201 = vmatprep.subr.mxu0 0.0
    %202 = vmatpush1.msra.mxu0 %v187
    %203 = vmatprep.subr.mxu0 0.0
    %204 = vmatpush1.msra.mxu0 %v186
    %205 = vmatprep.subr.mxu0 0.0
    %206 = vmatpush1.msra.mxu0 %v185
    %207 = vmatprep.subr.mxu0 0.0
    %208 = vmatpush1.msra.mxu0 %v184
    %209 = vmatprep.subr.mxu0 0.0
    %210 = vmatpush1.msra.mxu0 %v183
    %211 = vmatprep.subr.mxu0 0.0
    %212 = vmatpush1.msra.mxu0 %v182
    %213 = vmatprep.subr.mxu0 0.0
    %214 = vmatpush1.msra.mxu0 %v181
    %215 = vmatprep.subr.mxu0 0.0
    %216 = vmatpush1.msra.mxu0 %v180
    %217 = vmatprep.subr.mxu0 0.0
    %218 = vmatpush1.msra.mxu0 %v179
    %219 = vmatprep.subr.mxu0 0.0
    %220 = vmatpush1.msra.mxu0 %v178
    %221 = vmatprep.subr.mxu0 0.0
    %222 = vmatpush1.msra.mxu0 %v177
    %223 = vmatprep.subr.mxu0 0.0
    %224 = vmatpush1.msra.mxu0 %v176
    %225 = vmatprep.subr.mxu0 0.0
    %226 = vmatpush2.msra.mxu0 0.0
    %227 = vmatprep.subr.mxu0 0.0
    %228 = vmatpush2.msra.mxu0 0.0
    %229 = vmatprep.subr.mxu0 0.0
    %230 = vmatpush2.msra.mxu0 0.0
    %231 = vmatprep.subr.mxu0 0.0
    %232 = vmatpush2.msra.mxu0 0.0
    %233 = vmatprep.subr.mxu0 0.0
    %234 = vmatpush2.msra.mxu0 0.0
    %235 = vmatprep.subr.mxu0 0.0
    %236 = vmatpush2.msra.mxu0 0.0
    %237 = vmatprep.subr.mxu0 0.0
    %238 = vmatpush2.msra.mxu0 0.0
    %239 = vmatprep.subr.mxu0 0.0
    %240 = vmatpush2.msra.mxu0 0.0
    %241 = vmatprep.subr.mxu0 0.0
    %242 = vmatpush2.msra.mxu0 0.0
    %243 = vmatprep.subr.mxu0 0.0
    %244 = vmatpush2.msra.mxu0 0.0
    %245 = vmatprep.subr.mxu0 0.0
    %246 = vmatpush2.msra.mxu0 0.0
    %247 = vmatprep.subr.mxu0 0.0
    %248 = vmatpush2.msra.mxu0 0.0
    %249 = vmatprep.subr.mxu0 0.0
    %250 = vmatpush2.msra.mxu0 0.0
    %251 = vmatprep.subr.mxu0 0.0
    %252 = vmatpush2.msra.mxu0 0.0
    %253 = vmatprep.subr.mxu0 0.0
    %254 = vmatpush2.msra.mxu0 0.0
    %255 = vmatprep.subr.mxu0 0.0
    %256 = vmatpush2.msra.mxu0 0.0
    %257 = vmatprep.mubr.f32.mxu0 0.0
    %258 = vmatmul.mubr.f32.gmra.mxu0 %v175
    %v259 = vpop.f32.mrf.mxu0
    %v260 = vadd.f32 %v192, %v259
    %v261 = vpop.f32.mrf.mxu0
    %262 = vdwg.mxu0
    %263 = vst [vmem:[#allocation11] sm:$0x1] %v260
    %v264 = vld [vmem:[#allocation3] sm:$0x1]
    %vm265 = vcmask 1040384
    %v266 = vsel %vm265, %v260, -inf
    %267 = vmax.xlane.f32.xlu0 %v266
    %v268 = vpop.xlane.xlu0 %267
    %v269 = vmax.f32 %v264, %v268
    %v270 = vld [vmem:[#allocation4] sm:$0x1]
    %v271 = vsub.f32 %v264, %v269
    %v272 = vmul.f32 %v271, 1.442695
    %v273 = vpow.pop %v272
    %v274 = vmul.f32 %v270, %v273
    %276 = vset.pattern.permute.xlu0 0
    %277 = vperm.xlu0 %276, %v269
    %v278 = vpop.permute.xlu0 %277
    %v280 = vlaneseq
    %v281 = vshrl.u32 %v280, 7
    %v282 = vsub.s32 0, %v281
    %v283 = vrot.slane %v278, %v282
    %v284 = vsub.f32 %v260, %v283
    %v285 = vmul.f32 %v284, 1.442695
    %v286 = vpow.pop %v285
    %v287 = vsel %vm265, %v286, 0.0
    %288 = vadd.xlane.f32.xlu0 %v287
    %v289 = vpop.xlane.xlu0 %288
    %v290 = vadd.f32 %v274, %v289
    %vm291 = vcmask 0
    %292 = vst.msk [vmem:[#allocation4] sm:$0x1] %vm291, %v290
    %293 = vst.msk [vmem:[#allocation3] sm:$0x1] %vm291, %v269
    // Predicated region
    $region38: #{tpu_custom_call.1} parent=1 // pred_check
      %p294 = pneg %p82
    $region39: #{tpu_custom_call.1} parent=1 // pred_check_branch
      %296 = sbr.rel (%p294) target = $region41
    $region40: #{tpu_custom_call.1} parent=1 // pred_region
      %v297 = vld [vmem:[#allocation3] sm:$0x1]
      %v298 = vld [vmem:[#allocation4] sm:$0x1]
      %v299 = vlog2.pop %v298
      %v300 = vmul.f32 %v299, 0.6931472
      %v301 = vadd.f32 %v297, %v300
      %303 = vset.pattern.permute.xlu0 0
      %304 = vperm.xlu0 %303, %v301
      %v305 = vpop.permute.xlu0 %304
      %v307 = vlaneseq
      %v308 = vshrl.u32 %v307, 7
      %v309 = vsub.s32 0, %v308
      %v310 = vrot.slane %v305, %v309
      %311 = vst [vmem:[#allocation12] sm:$0x1] %v310
    $region41: #{tpu_custom_call.1} parent=1 // pred_fallthru
      _
    // Predicated region
    $region42: #{tpu_custom_call.1} parent=1 // pred_check
      _
    $region43: #{tpu_custom_call.1} parent=1 // pred_check_branch
      %313 = sbr.rel (0) target = $region45
    $region44: #{tpu_custom_call.1} parent=1 // pred_region
      %s314 = sadd.s32 0, 0
      %s316 = ssub.s32 16, 16
      %317 = vsyncadd [#allocation7], %s316
      %s318 = smul.addr %s314, 16
      %s319 = scalar_lea.hbm %s5, %s318
      %s321 = sshll.u32 [#allocation11], 4
      %s322 = int_to_ptr.vmem [resolvable:$true] %s321
      %324 = dma.vmem_to_hbm [thread:$0]  %s322, 16, %s319, [#allocation7]
    $region45: #{tpu_custom_call.1} parent=1 // pred_fallthru
      _
    // Predicated region
    $region46: #{tpu_custom_call.1} parent=1 // pred_check
      _
    $region47: #{tpu_custom_call.1} parent=1 // pred_check_branch
      %326 = sbr.rel (0) target = $region49
    $region48: #{tpu_custom_call.1} parent=1 // pred_region
      %s328 = ssub.s32 16, 16
      %329 = vsyncadd [#allocation13], %s328
      %s331 = sshll.u32 [#allocation12], 4
      %s332 = int_to_ptr.vmem [resolvable:$true] %s331
      %334 = dma.vmem_to_hbm [thread:$0]  %s332, 16, %s6, [#allocation13]
    $region49: #{tpu_custom_call.1} parent=1 // pred_fallthru
      _
    // Predicated region
    $region50: #{tpu_custom_call.1} parent=1 // pred_check
      _
    $region51: #{tpu_custom_call.1} parent=1 // pred_check_branch
      %336 = sbr.rel (0) target = $region53
    $region52: #{tpu_custom_call.1} parent=1 // pred_region
      %337 = dma.done [#allocation7], 16
    $region53: #{tpu_custom_call.1} parent=1 // pred_fallthru
      _
    // Predicated region
    $region54: #{tpu_custom_call.1} parent=1 // pred_check
      _
    $region55: #{tpu_custom_call.1} parent=1 // pred_check_branch
      %339 = sbr.rel (0) target = $region57
    $region56: #{tpu_custom_call.1} parent=1 // pred_region
      %340 = dma.done [#allocation13], 16
    $region57: #{tpu_custom_call.1} parent=1 // pred_fallthru
      _
    %341 = vsyncpa [#allocation6], 1
    %342 = vsyncpa [#allocation9], 1
    %343 = vsyncpa [#allocation7], 1
    %344 = vsyncpa [#allocation13], 1

</llo_original>
